<compile_context>
chip_gen: v6e
topology: v6e:2x2x1
jax: 0.10.0
libtpu: 0.0.40
codegen_flags: <defaults>
</compile_context>

<pallas_src>
import functools
import math

import jax
import jax.numpy as jnp
from jax import lax
from jax.experimental import pallas as pl
from jax.experimental.pallas import tpu as pltpu


# ----------------------------------------------------------------------------
# Kernel
# ----------------------------------------------------------------------------
def _attn_kernel(q_ref, k_ref, v_ref, o_ref, w_ref, *,
                 scale, num_heads, heads_per_chunk, head_dim, matmul_dtype):
    # q_ref: (tl, hc*D)  queries for this (batch, l-tile, head-chunk)
    # k_ref: (S,  hc*D)  keys    for this (batch, head-chunk)
    # v_ref: (S,  hc*D)  values  for this (batch, head-chunk)
    # o_ref: (tl, hc*D)  attention output block (single lane-dense store)
    # w_ref: (tl, S)     f32 head-mean weights, accumulated over head-chunks
    c = pl.program_id(2)

    @pl.when(c == 0)
    def _():
        w_ref[...] = jnp.zeros_like(w_ref)

    o_parts = []
    w_sum = None
    # Static loop over the (small, lane-aligned) number of heads in the chunk.
    for h in range(heads_per_chunk):
        lo = h * head_dim
        hi = lo + head_dim

        # Fold the softmax scale into q: a (tl, D) multiply instead of a
        # (tl, S) multiply on the score tile.
        q = q_ref[:, lo:hi] * scale
        k = k_ref[:, lo:hi]
        if matmul_dtype is not None:
            q = q.astype(matmul_dtype)
            k = k.astype(matmul_dtype)

        # scores = q @ k^T, contracting the D axes directly (no k transpose).
        s = lax.dot_general(q, k, (((1,), (1,)), ((), ())),
                            preferred_element_type=jnp.float32)

        # Numerically-stable softmax along the key axis, kept in f32.
        m = jnp.max(s, axis=-1, keepdims=True)
        p = jnp.exp(s - m)
        denom = jnp.sum(p, axis=-1, keepdims=True)
        # Exact reciprocal keeps 1e-5 parity with the reference; flip to
        # approx=True to move it onto the (idle) EUP if tolerance allows.
        p = p * pl.reciprocal(denom, approx=False)

        v = v_ref[:, lo:hi]
        pv_dtype = matmul_dtype if matmul_dtype is not None else v.dtype
        o = lax.dot_general(p.astype(pv_dtype), v.astype(pv_dtype),
                            (((1,), (0,)), ((), ())),
                            preferred_element_type=jnp.float32)
        o_parts.append(o.astype(o_ref.dtype))
        w_sum = p if w_sum is None else w_sum + p

    # One lane-dense (tl, hc*D) store for the whole head chunk.
    o_ref[...] = o_parts[0] if len(o_parts) == 1 else jnp.concatenate(o_parts, axis=-1)

    # Head-mean accumulation: this (tl, S) block stays VMEM-resident across the
    # innermost ("arbitrary") head-chunk axis; accumulate in place and
    # normalize on the last chunk.
    w_ref[...] += w_sum

    @pl.when(c == pl.num_programs(2) - 1)
    def _():
        w_ref[...] = w_ref[...] * (1.0 / num_heads)


# ----------------------------------------------------------------------------
# Tile / budget selection
# ----------------------------------------------------------------------------
def _cdiv(a, b):
    return (a + b - 1) // b


def _round_up(x, m):
    return ((x + m - 1) // m) * m


def _device_kind():
    try:
        return jax.devices()[0].device_kind.lower()
    except Exception:
        return ""


def _is_multicore_chip():
    # v7x has 2 TensorCores per chip; v5e/v6e have 1.
    return "v7" in _device_kind()


def _vmem_budget_bytes():
    """Scoped-VMEM budget (defaults are only 16/32 MiB, well below physical)."""
    kind = _device_kind()
    if "v7" in kind:
        return 48 * 1024 * 1024        # 64 MiB physical: leave headroom
    if any(t in kind for t in ("v5 lite", "v5e", "v5litepod", "v6", "trillium")):
        return 96 * 1024 * 1024        # 128 MiB physical
    return 64 * 1024 * 1024            # unknown generation: conservative


def _choose_tiles(N, L, S, H, D, itemsize, budget, *, l_tile=None, heads_per_chunk=None):
    # Head-chunk size: smallest divisor of H whose chunk width hc*D is a
    # multiple of 128 lanes (lane-dense Q/K/V/O blocks); else all heads.
    if heads_per_chunk is not None:
        assert H % heads_per_chunk == 0, "heads_per_chunk must divide H"
        hc = int(heads_per_chunk)
    else:
        hc = H
        for d in range(1, H + 1):
            if H % d == 0 and (d * D) % 128 == 0:
                hc = d
                break
    hd = hc * D

    def footprint(tl):
        kv = 2 * 2 * S * hd * itemsize    # double-buffered K and V input blocks
        qo = 2 * 2 * tl * hd * itemsize   # double-buffered Q input + O output blocks
        w = 2 * tl * S * 4                # f32 head-mean output block
        tmp = 3 * tl * S * 4              # scores / probs intermediates headroom
        return kv + qo + w + tmp

    if l_tile is not None:
        tl = min(int(l_tile), L)
        if tl != L and (tl % 8 != 0 or tl < 8):
            tl = min(L, max(8, (tl // 8) * 8))
    else:
        cands = {L} if L <= 512 else set()
        cands.update(t for t in (512, 256, 128, 64, 32, 16, 8) if t < L)
        tl = min(L, 8)
        for t in sorted(cands, reverse=True):
            if footprint(t) <= budget:
                tl = t
                break

    # v7x: make sure the "parallel" axes offer at least 2 programs.
    if _is_multicore_chip() and N * _cdiv(L, tl) < 2 and L >= 16:
        half = _round_up(_cdiv(L, 2), 8)
        if half < L:
            tl = min(tl, half)

    return tl, hc


# ----------------------------------------------------------------------------
# Wrapper
# ----------------------------------------------------------------------------
def attention_forward(queries, keys, values, scale=None, *,
                      l_tile=None, heads_per_chunk=None, matmul_dtype=None):
    """queries: (N, L, H, D); keys/values: (N, S, H, D).
    Returns (updated_values (N, L, H, D),
             mean attention weights over heads (N, L, S) in float32)."""
    N, L, H, D = queries.shape
    S = keys.shape[1]
    scale = float(scale) if scale is not None else 1.0 / math.sqrt(D)

    HD = H * D
    # Free reshapes (contiguous trailing-dim merge): no HBM transpose passes.
    q2 = queries.reshape(N, L, HD)
    k2 = keys.reshape(N, S, HD)
    v2 = values.reshape(N, S, HD)

    budget = _vmem_budget_bytes()
    itemsize = jnp.dtype(queries.dtype).itemsize
    tl, hc = _choose_tiles(N, L, S, H, D, itemsize, budget,
                           l_tile=l_tile, heads_per_chunk=heads_per_chunk)
    grid_l = _cdiv(L, tl)
    grid_c = H // hc

    kernel = functools.partial(
        _attn_kernel, scale=scale, num_heads=H,
        heads_per_chunk=hc, head_dim=D, matmul_dtype=matmul_dtype)

    # Invariant: head-chunk axis is innermost and "arbitrary" (the head-mean
    # output block accumulates across it); N / L-tile axes are "parallel".
    dim_semantics = ("parallel", "parallel", "arbitrary")

    out2, attn_mean = pl.pallas_call(
        kernel,
        out_shape=(
            jax.ShapeDtypeStruct((N, L, HD), queries.dtype),
            jax.ShapeDtypeStruct((N, L, S), jnp.float32),
        ),
        grid=(N, grid_l, grid_c),
        in_specs=[
            pl.BlockSpec((None, tl, hc * D), lambda n, l, c: (n, l, c)),
            pl.BlockSpec((None, S, hc * D), lambda n, l, c: (n, 0, c)),
            pl.BlockSpec((None, S, hc * D), lambda n, l, c: (n, 0, c)),
        ],
        out_specs=(
            pl.BlockSpec((None, tl, hc * D), lambda n, l, c: (n, l, c)),
            # Same block index across the head-chunk axis -> accumulator.
            pl.BlockSpec((None, tl, S), lambda n, l, c: (n, l, 0)),
        ),
        compiler_params=pltpu.CompilerParams(
            dimension_semantics=dim_semantics,
            vmem_limit_bytes=budget,
        ),
    )(q2, k2, v2)

    # Free reshape back to the PyTorch (N, L, H, D) convention.
    updated_values = out2.reshape(N, L, H, D)
    # NOTE: attn_mean is emitted in float32 regardless of input dtype.
    return updated_values, attn_mean


# ----------------------------------------------------------------------------
# Reference + test
# ----------------------------------------------------------------------------
def _reference(queries, keys, values, scale=None):
    N, L, H, D = queries.shape
    scale = scale if scale is not None else 1.0 / math.sqrt(D)
    scores = jnp.einsum("nlhd,nshd->nhls", queries, keys)
    weights = jax.nn.softmax(scale * scores, axis=-1)
    out = jnp.einsum("nhls,nshd->nlhd", weights, values)
    return out, jnp.mean(jnp.transpose(weights, (0, 2, 1, 3)), axis=-2)


if __name__ == "__main__":
    # Small shapes consistent with the forward: N x L x Head x d
    N, L, S, H, D = 2, 8, 8, 4, 32
    key = jax.random.PRNGKey(0)
    kq, kk, kv = jax.random.split(key, 3)
    q = jax.random.normal(kq, (N, L, H, D), dtype=jnp.float32)
    k = jax.random.normal(kk, (N, S, H, D), dtype=jnp.float32)
    v = jax.random.normal(kv, (N, S, H, D), dtype=jnp.float32)

    fwd = jax.jit(attention_forward)
    out, attn_mean = fwd(q, k, v)
    out = jax.block_until_ready(out)
    attn_mean = jax.block_until_ready(attn_mean)

    ref_out, ref_attn = _reference(q, k, v)
    assert out.shape == (N, L, H, D)
    assert attn_mean.shape == (N, L, S)
    assert jnp.allclose(out, ref_out, atol=1e-5, rtol=1e-5), \
        float(jnp.max(jnp.abs(out - ref_out)))
    assert jnp.allclose(attn_mean, ref_attn, atol=1e-5, rtol=1e-5), \
        float(jnp.max(jnp.abs(attn_mean - ref_attn)))

    print("KERNEL_OK")
</pallas_src>

<mosaic_0001>
module attributes {stable_mosaic.version = 11 : i64} {
  func.func @_attn_kernel(%arg0: i32, %arg1: i32, %arg2: i32, %arg3: memref<1x8x128xf32, #tpu.memory_space<vmem>>, %arg4: memref<1x8x128xf32, #tpu.memory_space<vmem>>, %arg5: memref<1x8x128xf32, #tpu.memory_space<vmem>>, %arg6: memref<1x8x128xf32, #tpu.memory_space<vmem>>, %arg7: memref<1x8x8xf32, #tpu.memory_space<vmem>>) attributes {dimension_semantics = [#tpu.dimension_semantics<parallel>, #tpu.dimension_semantics<parallel>, #tpu.dimension_semantics<arbitrary>], iteration_bounds = array<i64: 2, 1, 1>, scalar_prefetch = 0 : i64, scratch_operands = 0 : i64, tpu.core_type = #tpu.core_type<tc>, window_params = [{transform_indices = @transform_0, window_bounds = array<i64: 1, 8, 128>}, {transform_indices = @transform_1, window_bounds = array<i64: 1, 8, 128>}, {transform_indices = @transform_2, window_bounds = array<i64: 1, 8, 128>}, {transform_indices = @transform_3, window_bounds = array<i64: 1, 8, 128>}, {transform_indices = @transform_4, window_bounds = array<i64: 1, 8, 8>}]} {
    %c0_i32 = arith.constant 0 : i32
    %0 = arith.cmpi eq, %arg2, %c0_i32 : i32
    %1 = arith.extui %0 : i1 to i32
    %c0_i32_0 = arith.constant 0 : i32
    %2 = arith.cmpi ne, %1, %c0_i32_0 : i32
    scf.if %2 {
      %cst_63 = arith.constant 0.000000e+00 : f32
      %99 = vector.broadcast %cst_63 : f32 to vector<8x8xf32>
      %c0_64 = arith.constant 0 : index
      %c0_65 = arith.constant 0 : index
      %c0_66 = arith.constant 0 : index
      %100 = vector.load %arg7[%c0_64, %c0_65, %c0_66] : memref<1x8x8xf32, #tpu.memory_space<vmem>>, vector<1x8x8xf32>
      %101 = vector.shape_cast %100 : vector<1x8x8xf32> to vector<8x8xf32>
      %102 = vector.shape_cast %99 : vector<8x8xf32> to vector<1x8x8xf32>
      tpu.vector_store %arg7[%c0_64, %c0_65, %c0_66], %102 {strides = array<i32>} : memref<1x8x8xf32, #tpu.memory_space<vmem>>, vector<1x8x8xf32>,
    } else {
    }
    %c0 = arith.constant 0 : index
    %c0_1 = arith.constant 0 : index
    %c0_2 = arith.constant 0 : index
    %3 = vector.load %arg3[%c0, %c0_1, %c0_2] : memref<1x8x128xf32, #tpu.memory_space<vmem>>, vector<1x8x32xf32>
    %4 = vector.shape_cast %3 : vector<1x8x32xf32> to vector<8x32xf32>
    %cst = arith.constant 0.176776692 : f32
    %5 = vector.broadcast %cst : f32 to vector<8x32xf32>
    %6 = arith.mulf %4, %5 : vector<8x32xf32>
    %c0_3 = arith.constant 0 : index
    %c0_4 = arith.constant 0 : index
    %c0_5 = arith.constant 0 : index
    %7 = vector.load %arg4[%c0_3, %c0_4, %c0_5] : memref<1x8x128xf32, #tpu.memory_space<vmem>>, vector<1x8x32xf32>
    %8 = vector.shape_cast %7 : vector<1x8x32xf32> to vector<8x32xf32>
    %cst_6 = arith.constant dense<0.000000e+00> : vector<8x8xf32>
    %9 = tpu.matmul %6, %8, %cst_6 {dimension_numbers = #tpu.dot_dimension_numbers<[1], [1], [0], [0], [0, 0, 1, 0], [], []>} : vector<8x32xf32>, vector<8x32xf32>, vector<8x8xf32> -> vector<8x8xf32>
    %cst_7 = arith.constant dense<0xFF800000> : vector<8xf32>
    %10 = vector.multi_reduction <maximumf>, %9, %cst_7 [1] : vector<8x8xf32> to vector<8xf32>
    %11 = vector.shape_cast %10 : vector<8xf32> to vector<8x1xf32>
    %12 = vector.broadcast %11 : vector<8x1xf32> to vector<8x8xf32>
    %13 = arith.subf %9, %12 : vector<8x8xf32>
    %14 = math.exp %13 : vector<8x8xf32>
    %cst_8 = arith.constant dense<0.000000e+00> : vector<8xf32>
    %15 = vector.multi_reduction <add>, %14, %cst_8 [1] : vector<8x8xf32> to vector<8xf32>
    %16 = vector.shape_cast %15 : vector<8xf32> to vector<8x1xf32>
    %17 = tpu.reciprocal %16 : vector<8x1xf32> -> vector<8x1xf32>
    %18 = vector.broadcast %17 : vector<8x1xf32> to vector<8x8xf32>
    %19 = arith.mulf %14, %18 : vector<8x8xf32>
    %c0_9 = arith.constant 0 : index
    %c0_10 = arith.constant 0 : index
    %c0_11 = arith.constant 0 : index
    %20 = vector.load %arg5[%c0_9, %c0_10, %c0_11] : memref<1x8x128xf32, #tpu.memory_space<vmem>>, vector<1x8x32xf32>
    %21 = vector.shape_cast %20 : vector<1x8x32xf32> to vector<8x32xf32>
    %cst_12 = arith.constant dense<0.000000e+00> : vector<8x32xf32>
    %22 = tpu.matmul %19, %21, %cst_12 {dimension_numbers = #tpu.dot_dimension_numbers<[1], [0], [0], [1], [0, 0, 1, 1], [], []>} : vector<8x8xf32>, vector<8x32xf32>, vector<8x32xf32> -> vector<8x32xf32>
    %c0_13 = arith.constant 0 : index
    %c0_14 = arith.constant 0 : index
    %c32 = arith.constant 32 : index
    %23 = vector.load %arg3[%c0_13, %c0_14, %c32] : memref<1x8x128xf32, #tpu.memory_space<vmem>>, vector<1x8x32xf32>
    %24 = vector.shape_cast %23 : vector<1x8x32xf32> to vector<8x32xf32>
    %cst_15 = arith.constant 0.176776692 : f32
    %25 = vector.broadcast %cst_15 : f32 to vector<8x32xf32>
    %26 = arith.mulf %24, %25 : vector<8x32xf32>
    %c0_16 = arith.constant 0 : index
    %c0_17 = arith.constant 0 : index
    %c32_18 = arith.constant 32 : index
    %27 = vector.load %arg4[%c0_16, %c0_17, %c32_18] : memref<1x8x128xf32, #tpu.memory_space<vmem>>, vector<1x8x32xf32>
    %28 = vector.shape_cast %27 : vector<1x8x32xf32> to vector<8x32xf32>
    %cst_19 = arith.constant dense<0.000000e+00> : vector<8x8xf32>
    %29 = tpu.matmul %26, %28, %cst_19 {dimension_numbers = #tpu.dot_dimension_numbers<[1], [1], [0], [0], [0, 0, 1, 0], [], []>} : vector<8x32xf32>, vector<8x32xf32>, vector<8x8xf32> -> vector<8x8xf32>
    %cst_20 = arith.constant dense<0xFF800000> : vector<8xf32>
    %30 = vector.multi_reduction <maximumf>, %29, %cst_20 [1] : vector<8x8xf32> to vector<8xf32>
    %31 = vector.shape_cast %30 : vector<8xf32> to vector<8x1xf32>
    %32 = vector.broadcast %31 : vector<8x1xf32> to vector<8x8xf32>
    %33 = arith.subf %29, %32 : vector<8x8xf32>
    %34 = math.exp %33 : vector<8x8xf32>
    %cst_21 = arith.constant dense<0.000000e+00> : vector<8xf32>
    %35 = vector.multi_reduction <add>, %34, %cst_21 [1] : vector<8x8xf32> to vector<8xf32>
    %36 = vector.shape_cast %35 : vector<8xf32> to vector<8x1xf32>
    %37 = tpu.reciprocal %36 : vector<8x1xf32> -> vector<8x1xf32>
    %38 = vector.broadcast %37 : vector<8x1xf32> to vector<8x8xf32>
    %39 = arith.mulf %34, %38 : vector<8x8xf32>
    %c0_22 = arith.constant 0 : index
    %c0_23 = arith.constant 0 : index
    %c32_24 = arith.constant 32 : index
    %40 = vector.load %arg5[%c0_22, %c0_23, %c32_24] : memref<1x8x128xf32, #tpu.memory_space<vmem>>, vector<1x8x32xf32>
    %41 = vector.shape_cast %40 : vector<1x8x32xf32> to vector<8x32xf32>
    %cst_25 = arith.constant dense<0.000000e+00> : vector<8x32xf32>
    %42 = tpu.matmul %39, %41, %cst_25 {dimension_numbers = #tpu.dot_dimension_numbers<[1], [0], [0], [1], [0, 0, 1, 1], [], []>} : vector<8x8xf32>, vector<8x32xf32>, vector<8x32xf32> -> vector<8x32xf32>
    %43 = arith.addf %19, %39 : vector<8x8xf32>
    %c0_26 = arith.constant 0 : index
    %c0_27 = arith.constant 0 : index
    %c64 = arith.constant 64 : index
    %44 = vector.load %arg3[%c0_26, %c0_27, %c64] : memref<1x8x128xf32, #tpu.memory_space<vmem>>, vector<1x8x32xf32>
    %45 = vector.shape_cast %44 : vector<1x8x32xf32> to vector<8x32xf32>
    %cst_28 = arith.constant 0.176776692 : f32
    %46 = vector.broadcast %cst_28 : f32 to vector<8x32xf32>
    %47 = arith.mulf %45, %46 : vector<8x32xf32>
    %c0_29 = arith.constant 0 : index
    %c0_30 = arith.constant 0 : index
    %c64_31 = arith.constant 64 : index
    %48 = vector.load %arg4[%c0_29, %c0_30, %c64_31] : memref<1x8x128xf32, #tpu.memory_space<vmem>>, vector<1x8x32xf32>
    %49 = vector.shape_cast %48 : vector<1x8x32xf32> to vector<8x32xf32>
    %cst_32 = arith.constant dense<0.000000e+00> : vector<8x8xf32>
    %50 = tpu.matmul %47, %49, %cst_32 {dimension_numbers = #tpu.dot_dimension_numbers<[1], [1], [0], [0], [0, 0, 1, 0], [], []>} : vector<8x32xf32>, vector<8x32xf32>, vector<8x8xf32> -> vector<8x8xf32>
    %cst_33 = arith.constant dense<0xFF800000> : vector<8xf32>
    %51 = vector.multi_reduction <maximumf>, %50, %cst_33 [1] : vector<8x8xf32> to vector<8xf32>
    %52 = vector.shape_cast %51 : vector<8xf32> to vector<8x1xf32>
    %53 = vector.broadcast %52 : vector<8x1xf32> to vector<8x8xf32>
    %54 = arith.subf %50, %53 : vector<8x8xf32>
    %55 = math.exp %54 : vector<8x8xf32>
    %cst_34 = arith.constant dense<0.000000e+00> : vector<8xf32>
    %56 = vector.multi_reduction <add>, %55, %cst_34 [1] : vector<8x8xf32> to vector<8xf32>
    %57 = vector.shape_cast %56 : vector<8xf32> to vector<8x1xf32>
    %58 = tpu.reciprocal %57 : vector<8x1xf32> -> vector<8x1xf32>
    %59 = vector.broadcast %58 : vector<8x1xf32> to vector<8x8xf32>
    %60 = arith.mulf %55, %59 : vector<8x8xf32>
    %c0_35 = arith.constant 0 : index
    %c0_36 = arith.constant 0 : index
    %c64_37 = arith.constant 64 : index
    %61 = vector.load %arg5[%c0_35, %c0_36, %c64_37] : memref<1x8x128xf32, #tpu.memory_space<vmem>>, vector<1x8x32xf32>
    %62 = vector.shape_cast %61 : vector<1x8x32xf32> to vector<8x32xf32>
    %cst_38 = arith.constant dense<0.000000e+00> : vector<8x32xf32>
    %63 = tpu.matmul %60, %62, %cst_38 {dimension_numbers = #tpu.dot_dimension_numbers<[1], [0], [0], [1], [0, 0, 1, 1], [], []>} : vector<8x8xf32>, vector<8x32xf32>, vector<8x32xf32> -> vector<8x32xf32>
    %64 = arith.addf %43, %60 : vector<8x8xf32>
    %c0_39 = arith.constant 0 : index
    %c0_40 = arith.constant 0 : index
    %c96 = arith.constant 96 : index
    %65 = vector.load %arg3[%c0_39, %c0_40, %c96] : memref<1x8x128xf32, #tpu.memory_space<vmem>>, vector<1x8x32xf32>
    %66 = vector.shape_cast %65 : vector<1x8x32xf32> to vector<8x32xf32>
    %cst_41 = arith.constant 0.176776692 : f32
    %67 = vector.broadcast %cst_41 : f32 to vector<8x32xf32>
    %68 = arith.mulf %66, %67 : vector<8x32xf32>
    %c0_42 = arith.constant 0 : index
    %c0_43 = arith.constant 0 : index
    %c96_44 = arith.constant 96 : index
    %69 = vector.load %arg4[%c0_42, %c0_43, %c96_44] : memref<1x8x128xf32, #tpu.memory_space<vmem>>, vector<1x8x32xf32>
    %70 = vector.shape_cast %69 : vector<1x8x32xf32> to vector<8x32xf32>
    %cst_45 = arith.constant dense<0.000000e+00> : vector<8x8xf32>
    %71 = tpu.matmul %68, %70, %cst_45 {dimension_numbers = #tpu.dot_dimension_numbers<[1], [1], [0], [0], [0, 0, 1, 0], [], []>} : vector<8x32xf32>, vector<8x32xf32>, vector<8x8xf32> -> vector<8x8xf32>
    %cst_46 = arith.constant dense<0xFF800000> : vector<8xf32>
    %72 = vector.multi_reduction <maximumf>, %71, %cst_46 [1] : vector<8x8xf32> to vector<8xf32>
    %73 = vector.shape_cast %72 : vector<8xf32> to vector<8x1xf32>
    %74 = vector.broadcast %73 : vector<8x1xf32> to vector<8x8xf32>
    %75 = arith.subf %71, %74 : vector<8x8xf32>
    %76 = math.exp %75 : vector<8x8xf32>
    %cst_47 = arith.constant dense<0.000000e+00> : vector<8xf32>
    %77 = vector.multi_reduction <add>, %76, %cst_47 [1] : vector<8x8xf32> to vector<8xf32>
    %78 = vector.shape_cast %77 : vector<8xf32> to vector<8x1xf32>
    %79 = tpu.reciprocal %78 : vector<8x1xf32> -> vector<8x1xf32>
    %80 = vector.broadcast %79 : vector<8x1xf32> to vector<8x8xf32>
    %81 = arith.mulf %76, %80 : vector<8x8xf32>
    %c0_48 = arith.constant 0 : index
    %c0_49 = arith.constant 0 : index
    %c96_50 = arith.constant 96 : index
    %82 = vector.load %arg5[%c0_48, %c0_49, %c96_50] : memref<1x8x128xf32, #tpu.memory_space<vmem>>, vector<1x8x32xf32>
    %83 = vector.shape_cast %82 : vector<1x8x32xf32> to vector<8x32xf32>
    %cst_51 = arith.constant dense<0.000000e+00> : vector<8x32xf32>
    %84 = tpu.matmul %81, %83, %cst_51 {dimension_numbers = #tpu.dot_dimension_numbers<[1], [0], [0], [1], [0, 0, 1, 1], [], []>} : vector<8x8xf32>, vector<8x32xf32>, vector<8x32xf32> -> vector<8x32xf32>
    %85 = arith.addf %64, %81 : vector<8x8xf32>
    %86 = tpu.concatenate %22, %42, %63, %84 in 1 : vector<8x32xf32>, vector<8x32xf32>, vector<8x32xf32>, vector<8x32xf32> -> vector<8x128xf32>
    %c0_52 = arith.constant 0 : index
    %c0_53 = arith.constant 0 : index
    %c0_54 = arith.constant 0 : index
    %87 = vector.load %arg6[%c0_52, %c0_53, %c0_54] : memref<1x8x128xf32, #tpu.memory_space<vmem>>, vector<1x8x128xf32>
    %88 = vector.shape_cast %87 : vector<1x8x128xf32> to vector<8x128xf32>
    %89 = vector.shape_cast %86 : vector<8x128xf32> to vector<1x8x128xf32>
    tpu.vector_store %arg6[%c0_52, %c0_53, %c0_54], %89 {strides = array<i32>} : memref<1x8x128xf32, #tpu.memory_space<vmem>>, vector<1x8x128xf32>,
    %c0_55 = arith.constant 0 : index
    %c0_56 = arith.constant 0 : index
    %c0_57 = arith.constant 0 : index
    %90 = vector.load %arg7[%c0_55, %c0_56, %c0_57] : memref<1x8x8xf32, #tpu.memory_space<vmem>>, vector<1x8x8xf32>
    %91 = vector.shape_cast %90 : vector<1x8x8xf32> to vector<8x8xf32>
    %92 = arith.addf %91, %85 : vector<8x8xf32>
    %c0_58 = arith.constant 0 : index
    %c0_59 = arith.constant 0 : index
    %c0_60 = arith.constant 0 : index
    %93 = vector.load %arg7[%c0_58, %c0_59, %c0_60] : memref<1x8x8xf32, #tpu.memory_space<vmem>>, vector<1x8x8xf32>
    %94 = vector.shape_cast %93 : vector<1x8x8xf32> to vector<8x8xf32>
    %95 = vector.shape_cast %92 : vector<8x8xf32> to vector<1x8x8xf32>
    tpu.vector_store %arg7[%c0_58, %c0_59, %c0_60], %95 {strides = array<i32>} : memref<1x8x8xf32, #tpu.memory_space<vmem>>, vector<1x8x8xf32>,
    %c0_i32_61 = arith.constant 0 : i32
    %96 = arith.cmpi eq, %arg2, %c0_i32_61 : i32
    %97 = arith.extui %96 : i1 to i32
    %c0_i32_62 = arith.constant 0 : i32
    %98 = arith.cmpi ne, %97, %c0_i32_62 : i32
    scf.if %98 {
      %c0_63 = arith.constant 0 : index
      %c0_64 = arith.constant 0 : index
      %c0_65 = arith.constant 0 : index
      %99 = vector.load %arg7[%c0_63, %c0_64, %c0_65] : memref<1x8x8xf32, #tpu.memory_space<vmem>>, vector<1x8x8xf32>
      %100 = vector.shape_cast %99 : vector<1x8x8xf32> to vector<8x8xf32>
      %cst_66 = arith.constant 2.500000e-01 : f32
      %101 = vector.broadcast %cst_66 : f32 to vector<8x8xf32>
      %102 = arith.mulf %100, %101 : vector<8x8xf32>
      %c0_67 = arith.constant 0 : index
      %c0_68 = arith.constant 0 : index
      %c0_69 = arith.constant 0 : index
      %103 = vector.load %arg7[%c0_67, %c0_68, %c0_69] : memref<1x8x8xf32, #tpu.memory_space<vmem>>, vector<1x8x8xf32>
      %104 = vector.shape_cast %103 : vector<1x8x8xf32> to vector<8x8xf32>
      %105 = vector.shape_cast %102 : vector<8x8xf32> to vector<1x8x8xf32>
      tpu.vector_store %arg7[%c0_67, %c0_68, %c0_69], %105 {strides = array<i32>} : memref<1x8x8xf32, #tpu.memory_space<vmem>>, vector<1x8x8xf32>,
    } else {
    }
    return
  }
  func.func @transform_0(%arg0: i32, %arg1: i32, %arg2: i32) -> (i32, i32, i32) {
    %c0_i32 = arith.constant 0 : i32
    return %arg0, %arg1, %arg2 : i32, i32, i32
  }
  func.func @transform_1(%arg0: i32, %arg1: i32, %arg2: i32) -> (i32, i32, i32) {
    %c0_i32 = arith.constant 0 : i32
    %c0_i32_0 = arith.constant 0 : i32
    return %arg0, %c0_i32, %arg2 : i32, i32, i32
  }
  func.func @transform_2(%arg0: i32, %arg1: i32, %arg2: i32) -> (i32, i32, i32) {
    %c0_i32 = arith.constant 0 : i32
    %c0_i32_0 = arith.constant 0 : i32
    return %arg0, %c0_i32, %arg2 : i32, i32, i32
  }
  func.func @transform_3(%arg0: i32, %arg1: i32, %arg2: i32) -> (i32, i32, i32) {
    %c0_i32 = arith.constant 0 : i32
    return %arg0, %arg1, %arg2 : i32, i32, i32
  }
  func.func @transform_4(%arg0: i32, %arg1: i32, %arg2: i32) -> (i32, i32, i32) {
    %c0_i32 = arith.constant 0 : i32
    %c0_i32_0 = arith.constant 0 : i32
    return %arg0, %arg1, %c0_i32 : i32, i32, i32
  }
}

</mosaic_0001>

<llo_original>
// kernel: attention_forward.1
$region0: #{attention_forward.1}
  #allocation0 [shape = 'u32[]', space=smem, size = 0x4, offset = 0x4, fixed_abs, tag = 'smem constant byte address 0x4 - core index']
  #allocation1 [shape = 'u32[144,128]{1,0:T(1,128)}', space=vmem, size = 0x12000, scoped, tag = 'internal scratch']
  %s0 = inlined_call_operand.vmem [shape: f32[2,8,128], index: 0, kind: input, shape index: {}]
  %s1 = inlined_call_operand.vmem [shape: f32[2,8,128], index: 1, kind: input, shape index: {}]
  %s2 = inlined_call_operand.vmem [shape: f32[2,8,128], index: 2, kind: input, shape index: {}]
  %s3 = inlined_call_operand.vmem [shape: f32[2,8,128], index: 3, kind: output, shape index: {0}]
  %s4 = inlined_call_operand.hbm [shape: f32[2,8,8], index: 4, kind: output, shape index: {1}]
  %5 = xla_tuple %s3, %s4
  %s6 = sld [smem:[#allocation0]]
  $region61: #{attention_forward.1} parent=0
    _
  %s8 = ssub.s32 1, %s6
  %s9 = scalar_select 0, %s8, %s6
  $region1: #{attention_forward.1} parent=0
    #allocation2 [shape = 'u8[8192]{0}', space=vmem, size = 0x2000, scoped, tag = 'output window, operand 1']
    #allocation3 [shape = 's32[2]{0}', space=sflag, size = 0x8, scoped, tag = 'scoped memory for attention_forward.1']
    %10 = vsyncpa [#allocation3], 0
    %s11 = scalar_lea.sflag [#allocation3], 1
    %12 = vsyncpa %s11, 0
    loop: start=0, step=1, limit=4
    $region2: #{attention_forward.1} parent=1 // loop_pre_header
      _
    $region3: #{attention_forward.1} parent=1 // loop_header
      %s14 = sphi 0, %s18
      %p15 = scmp.ge.s32.totalorder %s14, 4
      %s21 = sphi 0, %s40
      %s22 = sphi 0, %s36
      %s23 = sphi 0, %s32
      %s24 = sphi 0, %s21
      %s25 = sphi 0, %s22
      %s26 = sphi 0, %s23
      %s27 = sphi 0, %s24
      %s28 = sphi 0, %s25
      %s29 = sphi 0, %s26
      %s47 = sphi 0, %s49
      %s50 = sphi 0, %s47
      %s51 = sphi 0, %s50
      %s67 = sphi 0, %s51
      %s75 = sphi 0, %s77
      %s78 = sphi 0, %s75
      %s79 = sphi 0, %s78
      %s95 = sphi 0, %s79
      %s103 = sphi 0, %s105
      %s106 = sphi 0, %s103
      %s107 = sphi 0, %s106
      %s123 = sphi 0, %s107
      %s133 = sphi 0, %s135
      %s136 = sphi 0, %s133
      %s137 = sphi 0, %s136
      %s153 = sphi 0, %s137
      %s161 = sphi 0, %s163
      %s164 = sphi 0, %s161
      %s165 = sphi 0, %s164
      %s181 = sphi 0, %s165
    $region4: #{attention_forward.1} parent=1 // loop_header_branch
      %17 = sbr.rel (%p15) target = $region8
    $region5: #{attention_forward.1} parent=1 // loop_body
      %s19 = ssub.s32 %s14, 1
      %s20 = ssub.s32 %s14, 2
      %s30 = sadd.s32 1, %s23
      %p31 = scmp.ge.s32.totalorder %s30, 1
      %s32 = scalar_select %p31, 0, %s30
      %s33 = sadd.s32 1, %s22
      %s34 = scalar_select %p31, %s33, %s22
      %p35 = scmp.ge.s32.totalorder %s34, 1
      %s36 = scalar_select %p35, 0, %s34
      %s37 = sadd.s32 1, %s21
      %s38 = scalar_select %p35, %s37, %s21
      %p39 = scmp.ge.s32.totalorder %s38, 2
      %s40 = scalar_select %p39, 0, %s38
      %s41 = ssub.s32 %s21, %s40
      %s42 = ssub.s32 %s22, %s36
      %s43 = sor.u32 %s41, %s42
      %s44 = ssub.s32 %s23, %s32
      %s45 = sor.u32 %s43, %s44
      %p46 = scmp.eq.s32.totalorder %s45, 0
      %s48 = sadd.s32 %s47, 1
      %s49 = scalar_select %p46, %s47, %s48
      %p52 = pneg %p46
      %p53 = scmp.eq.s32.totalorder %s14, 1
      %p54 = por %p52, %p53
      %p55 = scmp.ne.s32.totalorder %s47, %s50
      %p56 = scmp.eq.s32.totalorder %s14, 0
      %p57 = por %p55, %p56
      %p58 = scmp.ne.s32.totalorder %s47, %s50
      %p59 = scmp.eq.s32.totalorder %s19, 1
      %p60 = por %p58, %p59
      %p61 = scmp.ne.s32.totalorder %s50, %s51
      %p62 = scmp.eq.s32.totalorder %s19, 0
      %p63 = por %p61, %p62
      %p64 = scmp.ne.s32.totalorder %s50, %s51
      %p65 = scmp.eq.s32.totalorder %s20, 1
      %p66 = por %p64, %p65
      %p68 = scmp.ne.s32.totalorder %s51, %s67
      %p69 = scmp.eq.s32.totalorder %s20, 0
      %p70 = por %p68, %p69
      %s71 = ssub.s32 %s21, %s40
      %s72 = ssub.s32 %s23, %s32
      %s73 = sor.u32 %s71, %s72
      %p74 = scmp.eq.s32.totalorder %s73, 0
      %s76 = sadd.s32 %s75, 1
      %s77 = scalar_select %p74, %s75, %s76
      %p80 = pneg %p74
      %p81 = scmp.eq.s32.totalorder %s14, 1
      %p82 = por %p80, %p81
      %p83 = scmp.ne.s32.totalorder %s75, %s78
      %p84 = scmp.eq.s32.totalorder %s14, 0
      %p85 = por %p83, %p84
      %p86 = scmp.ne.s32.totalorder %s75, %s78
      %p87 = scmp.eq.s32.totalorder %s19, 1
      %p88 = por %p86, %p87
      %p89 = scmp.ne.s32.totalorder %s78, %s79
      %p90 = scmp.eq.s32.totalorder %s19, 0
      %p91 = por %p89, %p90
      %p92 = scmp.ne.s32.totalorder %s78, %s79
      %p93 = scmp.eq.s32.totalorder %s20, 1
      %p94 = por %p92, %p93
      %p96 = scmp.ne.s32.totalorder %s79, %s95
      %p97 = scmp.eq.s32.totalorder %s20, 0
      %p98 = por %p96, %p97
      %s99 = ssub.s32 %s21, %s40
      %s100 = ssub.s32 %s23, %s32
      %s101 = sor.u32 %s99, %s100
      %p102 = scmp.eq.s32.totalorder %s101, 0
      %s104 = sadd.s32 %s103, 1
      %s105 = scalar_select %p102, %s103, %s104
      %p108 = pneg %p102
      %p109 = scmp.eq.s32.totalorder %s14, 1
      %p110 = por %p108, %p109
      %p111 = scmp.ne.s32.totalorder %s103, %s106
      %p112 = scmp.eq.s32.totalorder %s14, 0
      %p113 = por %p111, %p112
      %p114 = scmp.ne.s32.totalorder %s103, %s106
      %p115 = scmp.eq.s32.totalorder %s19, 1
      %p116 = por %p114, %p115
      %p117 = scmp.ne.s32.totalorder %s106, %s107
      %p118 = scmp.eq.s32.totalorder %s19, 0
      %p119 = por %p117, %p118
      %p120 = scmp.ne.s32.totalorder %s106, %s107
      %p121 = scmp.eq.s32.totalorder %s20, 1
      %p122 = por %p120, %p121
      %p124 = scmp.ne.s32.totalorder %s107, %s123
      %p125 = scmp.eq.s32.totalorder %s20, 0
      %p126 = por %p124, %p125
      %s127 = ssub.s32 %s21, %s40
      %s128 = ssub.s32 %s22, %s36
      %s129 = sor.u32 %s127, %s128
      %s130 = ssub.s32 %s23, %s32
      %s131 = sor.u32 %s129, %s130
      %p132 = scmp.eq.s32.totalorder %s131, 0
      %s134 = sadd.s32 %s133, 1
      %s135 = scalar_select %p132, %s133, %s134
      %p138 = pneg %p132
      %p139 = scmp.eq.s32.totalorder %s14, 1
      %p140 = por %p138, %p139
      %p141 = scmp.ne.s32.totalorder %s133, %s136
      %p142 = scmp.eq.s32.totalorder %s14, 0
      %p143 = por %p141, %p142
      %p144 = scmp.ne.s32.totalorder %s133, %s136
      %p145 = scmp.eq.s32.totalorder %s19, 1
      %p146 = por %p144, %p145
      %p147 = scmp.ne.s32.totalorder %s136, %s137
      %p148 = scmp.eq.s32.totalorder %s19, 0
      %p149 = por %p147, %p148
      %p150 = scmp.ne.s32.totalorder %s136, %s137
      %p151 = scmp.eq.s32.totalorder %s20, 1
      %p152 = por %p150, %p151
      %p154 = scmp.ne.s32.totalorder %s137, %s153
      %p155 = scmp.eq.s32.totalorder %s20, 0
      %p156 = por %p154, %p155
      %s157 = ssub.s32 %s21, %s40
      %s158 = ssub.s32 %s22, %s36
      %s159 = sor.u32 %s157, %s158
      %p160 = scmp.eq.s32.totalorder %s159, 0
      %s162 = sadd.s32 %s161, 1
      %s163 = scalar_select %p160, %s161, %s162
      %p166 = pneg %p160
      %p167 = scmp.eq.s32.totalorder %s14, 1
      %p168 = por %p166, %p167
      %p169 = scmp.ne.s32.totalorder %s161, %s164
      %p170 = scmp.eq.s32.totalorder %s14, 0
      %p171 = por %p169, %p170
      %p172 = scmp.ne.s32.totalorder %s161, %s164
      %p173 = scmp.eq.s32.totalorder %s19, 1
      %p174 = por %p172, %p173
      %p175 = scmp.ne.s32.totalorder %s164, %s165
      %p176 = scmp.eq.s32.totalorder %s19, 0
      %p177 = por %p175, %p176
      %p178 = scmp.ne.s32.totalorder %s164, %s165
      %p179 = scmp.eq.s32.totalorder %s20, 1
      %p180 = por %p178, %p179
      %p182 = scmp.ne.s32.totalorder %s165, %s181
      %p183 = scmp.eq.s32.totalorder %s20, 0
      %p184 = por %p182, %p183
      %p185 = scmp.le.s32.totalorder 1, %s14
      %p186 = scmp.lt.s32.totalorder %s14, 3
      %p187 = pnand %p185, %p186
      %p188 = pneg %p187
      // Predicated region
      $region9: #{attention_forward.1} parent=5 // pred_check
        _
      $region10: #{attention_forward.1} parent=5 // pred_check_branch
        %190 = sbr.rel (%p187) target = $region12
      $region11: #{attention_forward.1} parent=5 // pred_region
        %s191 = ssub.s32 %s14, 1
      $region12: #{attention_forward.1} parent=5 // pred_fallthru
        _
      %p192 = scmp.lt.s32.totalorder %s14, 2
      // Predicated region
      $region13: #{attention_forward.1} parent=5 // pred_check
        %p193 = pneg %p192
      $region14: #{attention_forward.1} parent=5 // pred_check_branch
        %195 = sbr.rel (%p193) target = $region16
      $region15: #{attention_forward.1} parent=5 // pred_region
        // Predicated region
        $region17: #{attention_forward.1} parent=15 // pred_check
          %p196 = pneg %p57
        $region18: #{attention_forward.1} parent=15 // pred_check_branch
          %198 = sbr.rel (%p196) target = $region20
        $region19: #{attention_forward.1} parent=15 // pred_region
          %p199 = scmp.lt.s32.totalorder %s21, 1
          %s200 = scalar_select %p199, %s21, 1
          %p201 = scmp.lt.s32.totalorder %s22, 0
          %s202 = scalar_select %p201, %s22, 0
          %p203 = scmp.lt.s32.totalorder %s23, 0
          %s204 = scalar_select %p203, %s23, 0
          %s205 = sadd.s32 %s204, %s202
          %s206 = sadd.s32 %s205, %s200
          %s207 = smul.addr %s206, 8
          %s208 = scalar_lea.vmem %s0, %s207
        $region20: #{attention_forward.1} parent=15 // pred_fallthru
          _
        // Predicated region
        $region21: #{attention_forward.1} parent=15 // pred_check
          %p209 = pneg %p85
        $region22: #{attention_forward.1} parent=15 // pred_check_branch
          %211 = sbr.rel (%p209) target = $region24
        $region23: #{attention_forward.1} parent=15 // pred_region
          %p212 = scmp.lt.s32.totalorder %s21, 1
          %s213 = scalar_select %p212, %s21, 1
          %p214 = scmp.lt.s32.totalorder %s23, 0
          %s215 = scalar_select %p214, %s23, 0
          %s216 = sadd.s32 %s215, %s213
          %s217 = smul.addr %s216, 8
          %s218 = scalar_lea.vmem %s1, %s217
        $region24: #{attention_forward.1} parent=15 // pred_fallthru
          _
        // Predicated region
        $region25: #{attention_forward.1} parent=15 // pred_check
          %p219 = pneg %p113
        $region26: #{attention_forward.1} parent=15 // pred_check_branch
          %221 = sbr.rel (%p219) target = $region28
        $region27: #{attention_forward.1} parent=15 // pred_region
          %p222 = scmp.lt.s32.totalorder %s21, 1
          %s223 = scalar_select %p222, %s21, 1
          %p224 = scmp.lt.s32.totalorder %s23, 0
          %s225 = scalar_select %p224, %s23, 0
          %s226 = sadd.s32 %s225, %s223
          %s227 = smul.addr %s226, 8
          %s228 = scalar_lea.vmem %s2, %s227
        $region28: #{attention_forward.1} parent=15 // pred_fallthru
          _
      $region16: #{attention_forward.1} parent=5 // pred_fallthru
        _
      %p229 = scmp.le.s32.totalorder 1, %s14
      %p230 = scmp.lt.s32.totalorder %s14, 3
      %p231 = pnand %p229, %p230
      %p232 = pneg %p231
      // Predicated region
      $region29: #{attention_forward.1} parent=5 // pred_check
        _
      $region30: #{attention_forward.1} parent=5 // pred_check_branch
        %234 = sbr.rel (%p231) target = $region32
      $region31: #{attention_forward.1} parent=5 // pred_region
        %s235 = ssub.s32 %s14, 1
        %p236 = scmp.lt.s32.totalorder %s24, 1
        %s237 = scalar_select %p236, %s24, 1
        %p238 = scmp.lt.s32.totalorder %s25, 0
        %s239 = scalar_select %p238, %s25, 0
        %p240 = scmp.lt.s32.totalorder %s26, 0
        %s241 = scalar_select %p240, %s26, 0
        %s242 = sadd.s32 %s241, %s239
        %s243 = sadd.s32 %s242, %s237
        %s244 = smul.addr %s243, 8
        %s245 = scalar_lea.vmem %s0, %s244
        %p246 = pneg %p63
        %p247 = pneg %p60
        %p248 = scmp.lt.s32.totalorder %s24, 1
        %s249 = scalar_select %p248, %s24, 1
        %p250 = scmp.lt.s32.totalorder %s26, 0
        %s251 = scalar_select %p250, %s26, 0
        %s252 = sadd.s32 %s251, %s249
        %s253 = smul.addr %s252, 8
        %s254 = scalar_lea.vmem %s1, %s253
        %p255 = pneg %p91
        %p256 = pneg %p88
        %p257 = scmp.lt.s32.totalorder %s24, 1
        %s258 = scalar_select %p257, %s24, 1
        %p259 = scmp.lt.s32.totalorder %s26, 0
        %s260 = scalar_select %p259, %s26, 0
        %s261 = sadd.s32 %s260, %s258
        %s262 = smul.addr %s261, 8
        %s263 = scalar_lea.vmem %s2, %s262
        %p264 = pneg %p119
        %p265 = pneg %p116
        %p266 = pneg %p149
        %p267 = pneg %p146
        %p268 = scmp.lt.s32.totalorder %s24, 1
        %s269 = scalar_select %p268, %s24, 1
        %p270 = scmp.lt.s32.totalorder %s25, 0
        %s271 = scalar_select %p270, %s25, 0
        %p272 = scmp.lt.s32.totalorder %s26, 0
        %s273 = scalar_select %p272, %s26, 0
        %s274 = sadd.s32 %s273, %s271
        %s275 = sadd.s32 %s274, %s269
        %s276 = smul.addr %s275, 8
        %s277 = scalar_lea.vmem %s3, %s276
        %p278 = pneg %p177
        %p279 = pneg %p174
        %s280 = sand.u32 %s164, 1
        %s281 = scalar_lea.sflag [#allocation3], %s280
        %s282 = sand.u32 %s164, 1
        %s283 = smul.addr %s282, 8
        %s284 = scalar_lea.vmem [#allocation2], %s283
        %p285 = scmp.lt.s32.totalorder %s24, 1
        %s286 = scalar_select %p285, %s24, 1
        %p287 = scmp.lt.s32.totalorder %s25, 0
        %s288 = scalar_select %p287, %s25, 0
        %p289 = scmp.lt.s32.totalorder %s26, 0
        %s290 = scalar_select %p289, %s26, 0
        %s291 = sadd.s32 %s290, %s288
        %s292 = sadd.s32 %s291, %s286
        %s293 = smul.addr %s292, 8
        %s294 = scalar_lea.vmem %s0, %s293
        %p295 = scmp.lt.s32.totalorder %s24, 1
        %s296 = scalar_select %p295, %s24, 1
        %p297 = scmp.lt.s32.totalorder %s26, 0
        %s298 = scalar_select %p297, %s26, 0
        %s299 = sadd.s32 %s298, %s296
        %s300 = smul.addr %s299, 8
        %s301 = scalar_lea.vmem %s1, %s300
        %p302 = scmp.lt.s32.totalorder %s24, 1
        %s303 = scalar_select %p302, %s24, 1
        %p304 = scmp.lt.s32.totalorder %s26, 0
        %s305 = scalar_select %p304, %s26, 0
        %s306 = sadd.s32 %s305, %s303
        %s307 = smul.addr %s306, 8
        %s308 = scalar_lea.vmem %s2, %s307
        %p309 = scmp.lt.s32.totalorder %s24, 1
        %s310 = scalar_select %p309, %s24, 1
        %p311 = scmp.lt.s32.totalorder %s25, 0
        %s312 = scalar_select %p311, %s25, 0
        %p313 = scmp.lt.s32.totalorder %s26, 0
        %s314 = scalar_select %p313, %s26, 0
        %s315 = sadd.s32 %s314, %s312
        %s316 = sadd.s32 %s315, %s310
        %s317 = smul.addr %s316, 8
        %s318 = scalar_lea.vmem %s3, %s317
        %p319 = scmp.eq.s32.totalorder %s26, 0
        // Predicated region
        $region33: #{attention_forward.1} parent=31 // pred_check
          %p320 = pneg %p319
        $region34: #{attention_forward.1} parent=31 // pred_check_branch
          %322 = sbr.rel (%p320) target = $region36
        $region35: #{attention_forward.1} parent=31 // pred_region
          %vm323 = vcmask 64512
          %324 = vst.msk [vmem:[%s284] sm:$0xff] %vm323, 0.0
        $region36: #{attention_forward.1} parent=31 // pred_fallthru
          _
        %v325 = vld [vmem:[%s294] sm:$0xff]
        %v326 = vmul.f32 %v325, 0.17677669
        %v327 = vld [vmem:[%s301] sm:$0xff]
        %vm328 = vcmask 261120
        %v330 = vsel %vm328, %v326, 0
        %v333 = vsel %vm328, %v327, 0
        %335 = vmatprep.subr.mxu0 0.0
        %336 = vmatpush1.xpose.msra.mxu0 0.0
        %337 = vmatprep.subr.mxu0 0.0
        %338 = vmatpush1.xpose.msra.mxu0 0.0
        %339 = vmatprep.subr.mxu0 0.0
        %340 = vmatpush1.xpose.msra.mxu0 0.0
        %341 = vmatprep.subr.mxu0 0.0
        %342 = vmatpush1.xpose.msra.mxu0 0.0
        %343 = vmatprep.subr.mxu0 0.0
        %344 = vmatpush1.xpose.msra.mxu0 0.0
        %345 = vmatprep.subr.mxu0 0.0
        %346 = vmatpush1.xpose.msra.mxu0 0.0
        %347 = vmatprep.subr.mxu0 0.0
        %348 = vmatpush1.xpose.msra.mxu0 0.0
        %349 = vmatprep.subr.mxu0 0.0
        %350 = vmatpush1.xpose.msra.mxu0 0.0
        %351 = vmatprep.subr.mxu0 0.0
        %352 = vmatpush1.xpose.msra.mxu0 0.0
        %353 = vmatprep.subr.mxu0 0.0
        %354 = vmatpush1.xpose.msra.mxu0 0.0
        %355 = vmatprep.subr.mxu0 0.0
        %356 = vmatpush1.xpose.msra.mxu0 0.0
        %357 = vmatprep.subr.mxu0 0.0
        %358 = vmatpush1.xpose.msra.mxu0 0.0
        %359 = vmatprep.subr.mxu0 0.0
        %360 = vmatpush1.xpose.msra.mxu0 0.0
        %361 = vmatprep.subr.mxu0 0.0
        %362 = vmatpush1.xpose.msra.mxu0 0.0
        %363 = vmatprep.subr.mxu0 0.0
        %364 = vmatpush1.xpose.msra.mxu0 0.0
        %365 = vmatprep.subr.mxu0 0.0
        %366 = vmatpush1.xpose.msra.mxu0 %v333
        %367 = vmatprep.subr.mxu0 0.0
        %368 = vmatpush2.xpose.msra.mxu0 0.0
        %369 = vmatprep.subr.mxu0 0.0
        %370 = vmatpush2.xpose.msra.mxu0 0.0
        %371 = vmatprep.subr.mxu0 0.0
        %372 = vmatpush2.xpose.msra.mxu0 0.0
        %373 = vmatprep.subr.mxu0 0.0
        %374 = vmatpush2.xpose.msra.mxu0 0.0
        %375 = vmatprep.subr.mxu0 0.0
        %376 = vmatpush2.xpose.msra.mxu0 0.0
        %377 = vmatprep.subr.mxu0 0.0
        %378 = vmatpush2.xpose.msra.mxu0 0.0
        %379 = vmatprep.subr.mxu0 0.0
        %380 = vmatpush2.xpose.msra.mxu0 0.0
        %381 = vmatprep.subr.mxu0 0.0
        %382 = vmatpush2.xpose.msra.mxu0 0.0
        %383 = vmatprep.subr.mxu0 0.0
        %384 = vmatpush2.xpose.msra.mxu0 0.0
        %385 = vmatprep.subr.mxu0 0.0
        %386 = vmatpush2.xpose.msra.mxu0 0.0
        %387 = vmatprep.subr.mxu0 0.0
        %388 = vmatpush2.xpose.msra.mxu0 0.0
        %389 = vmatprep.subr.mxu0 0.0
        %390 = vmatpush2.xpose.msra.mxu0 0.0
        %391 = vmatprep.subr.mxu0 0.0
        %392 = vmatpush2.xpose.msra.mxu0 0.0
        %393 = vmatprep.subr.mxu0 0.0
        %394 = vmatpush2.xpose.msra.mxu0 0.0
        %395 = vmatprep.subr.mxu0 0.0
        %396 = vmatpush2.xpose.msra.mxu0 0.0
        %397 = vmatprep.subr.mxu0 0.0
        %398 = vmatpush2.xpose.msra.mxu0 0.0
        %399 = vmatprep.mubr.f32.mxu0 0.0
        %400 = vmatmul.mubr.f32.gmra.mxu0 %v330
        %v401 = vpop.f32.mrf.mxu0
        %v402 = vadd.f32 0.0, %v401
        %v403 = vpop.f32.mrf.mxu0
        %404 = vdwg.mxu0
        %vm405 = vcmask 64512
        %v406 = vsel %vm405, %v402, -inf
        %407 = vmax.xlane.f32.xlu0 %v406
        %v408 = vpop.xlane.xlu0 %407
        %v409 = vsub.f32 %v402, %v408
        %v410 = vmul.f32 %v409, 1.442695
        %v411 = vpow.pop %v410
        %v412 = vsel %vm405, %v411, 0.0
        %413 = vadd.xlane.f32.xlu0 %v412
        %v414 = vpop.xlane.xlu0 %413
        %v415 = vrcp.pop %v414
        %v416 = vmul.f32 %v411, %v415
        %v417 = vld [vmem:[%s308] sm:$0xff]
        %v419 = vsel %vm405, %v416, 0
        %421 = vmatprep.subr.mxu0 0.0
        %422 = vmatpush1.msra.mxu0 0.0
        %423 = vmatprep.subr.mxu0 0.0
        %424 = vmatpush1.msra.mxu0 0.0
        %425 = vmatprep.subr.mxu0 0.0
        %426 = vmatpush1.msra.mxu0 0.0
        %427 = vmatprep.subr.mxu0 0.0
        %428 = vmatpush1.msra.mxu0 0.0
        %429 = vmatprep.subr.mxu0 0.0
        %430 = vmatpush1.msra.mxu0 0.0
        %431 = vmatprep.subr.mxu0 0.0
        %432 = vmatpush1.msra.mxu0 0.0
        %433 = vmatprep.subr.mxu0 0.0
        %434 = vmatpush1.msra.mxu0 0.0
        %435 = vmatprep.subr.mxu0 0.0
        %436 = vmatpush1.msra.mxu0 0.0
        %437 = vmatprep.subr.mxu0 0.0
        %438 = vmatpush1.msra.mxu0 0.0
        %439 = vmatprep.subr.mxu0 0.0
        %440 = vmatpush1.msra.mxu0 0.0
        %441 = vmatprep.subr.mxu0 0.0
        %442 = vmatpush1.msra.mxu0 0.0
        %443 = vmatprep.subr.mxu0 0.0
        %444 = vmatpush1.msra.mxu0 0.0
        %445 = vmatprep.subr.mxu0 0.0
        %446 = vmatpush1.msra.mxu0 0.0
        %447 = vmatprep.subr.mxu0 0.0
        %448 = vmatpush1.msra.mxu0 0.0
        %449 = vmatprep.subr.mxu0 0.0
        %450 = vmatpush1.msra.mxu0 0.0
        %451 = vmatprep.subr.mxu0 0.0
        %452 = vmatpush1.msra.mxu0 %v417
        %453 = vmatprep.subr.mxu0 0.0
        %454 = vmatpush2.msra.mxu0 0.0
        %455 = vmatprep.subr.mxu0 0.0
        %456 = vmatpush2.msra.mxu0 0.0
        %457 = vmatprep.subr.mxu0 0.0
        %458 = vmatpush2.msra.mxu0 0.0
        %459 = vmatprep.subr.mxu0 0.0
        %460 = vmatpush2.msra.mxu0 0.0
        %461 = vmatprep.subr.mxu0 0.0
        %462 = vmatpush2.msra.mxu0 0.0
        %463 = vmatprep.subr.mxu0 0.0
        %464 = vmatpush2.msra.mxu0 0.0
        %465 = vmatprep.subr.mxu0 0.0
        %466 = vmatpush2.msra.mxu0 0.0
        %467 = vmatprep.subr.mxu0 0.0
        %468 = vmatpush2.msra.mxu0 0.0
        %469 = vmatprep.subr.mxu0 0.0
        %470 = vmatpush2.msra.mxu0 0.0
        %471 = vmatprep.subr.mxu0 0.0
        %472 = vmatpush2.msra.mxu0 0.0
        %473 = vmatprep.subr.mxu0 0.0
        %474 = vmatpush2.msra.mxu0 0.0
        %475 = vmatprep.subr.mxu0 0.0
        %476 = vmatpush2.msra.mxu0 0.0
        %477 = vmatprep.subr.mxu0 0.0
        %478 = vmatpush2.msra.mxu0 0.0
        %479 = vmatprep.subr.mxu0 0.0
        %480 = vmatpush2.msra.mxu0 0.0
        %481 = vmatprep.subr.mxu0 0.0
        %482 = vmatpush2.msra.mxu0 0.0
        %483 = vmatprep.subr.mxu0 0.0
        %484 = vmatpush2.msra.mxu0 0.0
        %485 = vmatprep.mubr.f32.mxu0 0.0
        %486 = vmatmul.mubr.f32.gmra.mxu0 %v419
        %v487 = vpop.f32.mrf.mxu0
        %v488 = vadd.f32 0.0, %v487
        %v489 = vpop.f32.mrf.mxu0
        %490 = vdwg.mxu0
        %491 = vrot.lane.b32.xlu0 %v326, 96
        %v492 = vpop.permute.xlu0 %491
        %493 = vrot.lane.b32.xlu0 %v327, 96
        %v494 = vpop.permute.xlu0 %493
        %v495 = vsel %vm328, %v492, 0
        %v497 = vsel %vm328, %v494, 0
        %499 = vmatprep.subr.mxu0 0.0
        %500 = vmatpush1.xpose.msra.mxu0 0.0
        %501 = vmatprep.subr.mxu0 0.0
        %502 = vmatpush1.xpose.msra.mxu0 0.0
        %503 = vmatprep.subr.mxu0 0.0
        %504 = vmatpush1.xpose.msra.mxu0 0.0
        %505 = vmatprep.subr.mxu0 0.0
        %506 = vmatpush1.xpose.msra.mxu0 0.0
        %507 = vmatprep.subr.mxu0 0.0
        %508 = vmatpush1.xpose.msra.mxu0 0.0
        %509 = vmatprep.subr.mxu0 0.0
        %510 = vmatpush1.xpose.msra.mxu0 0.0
        %511 = vmatprep.subr.mxu0 0.0
        %512 = vmatpush1.xpose.msra.mxu0 0.0
        %513 = vmatprep.subr.mxu0 0.0
        %514 = vmatpush1.xpose.msra.mxu0 0.0
        %515 = vmatprep.subr.mxu0 0.0
        %516 = vmatpush1.xpose.msra.mxu0 0.0
        %517 = vmatprep.subr.mxu0 0.0
        %518 = vmatpush1.xpose.msra.mxu0 0.0
        %519 = vmatprep.subr.mxu0 0.0
        %520 = vmatpush1.xpose.msra.mxu0 0.0
        %521 = vmatprep.subr.mxu0 0.0
        %522 = vmatpush1.xpose.msra.mxu0 0.0
        %523 = vmatprep.subr.mxu0 0.0
        %524 = vmatpush1.xpose.msra.mxu0 0.0
        %525 = vmatprep.subr.mxu0 0.0
        %526 = vmatpush1.xpose.msra.mxu0 0.0
        %527 = vmatprep.subr.mxu0 0.0
        %528 = vmatpush1.xpose.msra.mxu0 0.0
        %529 = vmatprep.subr.mxu0 0.0
        %530 = vmatpush1.xpose.msra.mxu0 %v497
        %531 = vmatprep.subr.mxu0 0.0
        %532 = vmatpush2.xpose.msra.mxu0 0.0
        %533 = vmatprep.subr.mxu0 0.0
        %534 = vmatpush2.xpose.msra.mxu0 0.0
        %535 = vmatprep.subr.mxu0 0.0
        %536 = vmatpush2.xpose.msra.mxu0 0.0
        %537 = vmatprep.subr.mxu0 0.0
        %538 = vmatpush2.xpose.msra.mxu0 0.0
        %539 = vmatprep.subr.mxu0 0.0
        %540 = vmatpush2.xpose.msra.mxu0 0.0
        %541 = vmatprep.subr.mxu0 0.0
        %542 = vmatpush2.xpose.msra.mxu0 0.0
        %543 = vmatprep.subr.mxu0 0.0
        %544 = vmatpush2.xpose.msra.mxu0 0.0
        %545 = vmatprep.subr.mxu0 0.0
        %546 = vmatpush2.xpose.msra.mxu0 0.0
        %547 = vmatprep.subr.mxu0 0.0
        %548 = vmatpush2.xpose.msra.mxu0 0.0
        %549 = vmatprep.subr.mxu0 0.0
        %550 = vmatpush2.xpose.msra.mxu0 0.0
        %551 = vmatprep.subr.mxu0 0.0
        %552 = vmatpush2.xpose.msra.mxu0 0.0
        %553 = vmatprep.subr.mxu0 0.0
        %554 = vmatpush2.xpose.msra.mxu0 0.0
        %555 = vmatprep.subr.mxu0 0.0
        %556 = vmatpush2.xpose.msra.mxu0 0.0
        %557 = vmatprep.subr.mxu0 0.0
        %558 = vmatpush2.xpose.msra.mxu0 0.0
        %559 = vmatprep.subr.mxu0 0.0
        %560 = vmatpush2.xpose.msra.mxu0 0.0
        %561 = vmatprep.subr.mxu0 0.0
        %562 = vmatpush2.xpose.msra.mxu0 0.0
        %563 = vmatprep.mubr.f32.mxu0 0.0
        %564 = vmatmul.mubr.f32.gmra.mxu0 %v495
        %v565 = vpop.f32.mrf.mxu0
        %v566 = vadd.f32 0.0, %v565
        %v567 = vpop.f32.mrf.mxu0
        %568 = vdwg.mxu0
        %v569 = vsel %vm405, %v566, -inf
        %570 = vmax.xlane.f32.xlu0 %v569
        %v571 = vpop.xlane.xlu0 %570
        %v572 = vsub.f32 %v566, %v571
        %v573 = vmul.f32 %v572, 1.442695
        %v574 = vpow.pop %v573
        %v575 = vsel %vm405, %v574, 0.0
        %576 = vadd.xlane.f32.xlu0 %v575
        %v577 = vpop.xlane.xlu0 %576
        %v578 = vrcp.pop %v577
        %v579 = vmul.f32 %v574, %v578
        %581 = vrot.lane.b32.xlu0 %v417, 96
        %v582 = vpop.permute.xlu0 %581
        %v585 = vsel %vm405, %v579, 0
        %587 = vmatprep.subr.mxu0 0.0
        %588 = vmatpush1.msra.mxu0 0.0
        %589 = vmatprep.subr.mxu0 0.0
        %590 = vmatpush1.msra.mxu0 0.0
        %591 = vmatprep.subr.mxu0 0.0
        %592 = vmatpush1.msra.mxu0 0.0
        %593 = vmatprep.subr.mxu0 0.0
        %594 = vmatpush1.msra.mxu0 0.0
        %595 = vmatprep.subr.mxu0 0.0
        %596 = vmatpush1.msra.mxu0 0.0
        %597 = vmatprep.subr.mxu0 0.0
        %598 = vmatpush1.msra.mxu0 0.0
        %599 = vmatprep.subr.mxu0 0.0
        %600 = vmatpush1.msra.mxu0 0.0
        %601 = vmatprep.subr.mxu0 0.0
        %602 = vmatpush1.msra.mxu0 0.0
        %603 = vmatprep.subr.mxu0 0.0
        %604 = vmatpush1.msra.mxu0 0.0
        %605 = vmatprep.subr.mxu0 0.0
        %606 = vmatpush1.msra.mxu0 0.0
        %607 = vmatprep.subr.mxu0 0.0
        %608 = vmatpush1.msra.mxu0 0.0
        %609 = vmatprep.subr.mxu0 0.0
        %610 = vmatpush1.msra.mxu0 0.0
        %611 = vmatprep.subr.mxu0 0.0
        %612 = vmatpush1.msra.mxu0 0.0
        %613 = vmatprep.subr.mxu0 0.0
        %614 = vmatpush1.msra.mxu0 0.0
        %615 = vmatprep.subr.mxu0 0.0
        %616 = vmatpush1.msra.mxu0 0.0
        %617 = vmatprep.subr.mxu0 0.0
        %618 = vmatpush1.msra.mxu0 %v582
        %619 = vmatprep.subr.mxu0 0.0
        %620 = vmatpush2.msra.mxu0 0.0
        %621 = vmatprep.subr.mxu0 0.0
        %622 = vmatpush2.msra.mxu0 0.0
        %623 = vmatprep.subr.mxu0 0.0
        %624 = vmatpush2.msra.mxu0 0.0
        %625 = vmatprep.subr.mxu0 0.0
        %626 = vmatpush2.msra.mxu0 0.0
        %627 = vmatprep.subr.mxu0 0.0
        %628 = vmatpush2.msra.mxu0 0.0
        %629 = vmatprep.subr.mxu0 0.0
        %630 = vmatpush2.msra.mxu0 0.0
        %631 = vmatprep.subr.mxu0 0.0
        %632 = vmatpush2.msra.mxu0 0.0
        %633 = vmatprep.subr.mxu0 0.0
        %634 = vmatpush2.msra.mxu0 0.0
        %635 = vmatprep.subr.mxu0 0.0
        %636 = vmatpush2.msra.mxu0 0.0
        %637 = vmatprep.subr.mxu0 0.0
        %638 = vmatpush2.msra.mxu0 0.0
        %639 = vmatprep.subr.mxu0 0.0
        %640 = vmatpush2.msra.mxu0 0.0
        %641 = vmatprep.subr.mxu0 0.0
        %642 = vmatpush2.msra.mxu0 0.0
        %643 = vmatprep.subr.mxu0 0.0
        %644 = vmatpush2.msra.mxu0 0.0
        %645 = vmatprep.subr.mxu0 0.0
        %646 = vmatpush2.msra.mxu0 0.0
        %647 = vmatprep.subr.mxu0 0.0
        %648 = vmatpush2.msra.mxu0 0.0
        %649 = vmatprep.subr.mxu0 0.0
        %650 = vmatpush2.msra.mxu0 0.0
        %651 = vmatprep.mubr.f32.mxu0 0.0
        %652 = vmatmul.mubr.f32.gmra.mxu0 %v585
        %v653 = vpop.f32.mrf.mxu0
        %v654 = vadd.f32 0.0, %v653
        %v655 = vpop.f32.mrf.mxu0
        %656 = vdwg.mxu0
        %v657 = vadd.f32 %v416, %v579
        %658 = vrot.lane.b32.xlu0 %v326, 64
        %v659 = vpop.permute.xlu0 %658
        %660 = vrot.lane.b32.xlu0 %v327, 64
        %v661 = vpop.permute.xlu0 %660
        %v662 = vsel %vm328, %v659, 0
        %v664 = vsel %vm328, %v661, 0
        %666 = vmatprep.subr.mxu0 0.0
        %667 = vmatpush1.xpose.msra.mxu0 0.0
        %668 = vmatprep.subr.mxu0 0.0
        %669 = vmatpush1.xpose.msra.mxu0 0.0
        %670 = vmatprep.subr.mxu0 0.0
        %671 = vmatpush1.xpose.msra.mxu0 0.0
        %672 = vmatprep.subr.mxu0 0.0
        %673 = vmatpush1.xpose.msra.mxu0 0.0
        %674 = vmatprep.subr.mxu0 0.0
        %675 = vmatpush1.xpose.msra.mxu0 0.0
        %676 = vmatprep.subr.mxu0 0.0
        %677 = vmatpush1.xpose.msra.mxu0 0.0
        %678 = vmatprep.subr.mxu0 0.0
        %679 = vmatpush1.xpose.msra.mxu0 0.0
        %680 = vmatprep.subr.mxu0 0.0
        %681 = vmatpush1.xpose.msra.mxu0 0.0
        %682 = vmatprep.subr.mxu0 0.0
        %683 = vmatpush1.xpose.msra.mxu0 0.0
        %684 = vmatprep.subr.mxu0 0.0
        %685 = vmatpush1.xpose.msra.mxu0 0.0
        %686 = vmatprep.subr.mxu0 0.0
        %687 = vmatpush1.xpose.msra.mxu0 0.0
        %688 = vmatprep.subr.mxu0 0.0
        %689 = vmatpush1.xpose.msra.mxu0 0.0
        %690 = vmatprep.subr.mxu0 0.0
        %691 = vmatpush1.xpose.msra.mxu0 0.0
        %692 = vmatprep.subr.mxu0 0.0
        %693 = vmatpush1.xpose.msra.mxu0 0.0
        %694 = vmatprep.subr.mxu0 0.0
        %695 = vmatpush1.xpose.msra.mxu0 0.0
        %696 = vmatprep.subr.mxu0 0.0
        %697 = vmatpush1.xpose.msra.mxu0 %v664
        %698 = vmatprep.subr.mxu0 0.0
        %699 = vmatpush2.xpose.msra.mxu0 0.0
        %700 = vmatprep.subr.mxu0 0.0
        %701 = vmatpush2.xpose.msra.mxu0 0.0
        %702 = vmatprep.subr.mxu0 0.0
        %703 = vmatpush2.xpose.msra.mxu0 0.0
        %704 = vmatprep.subr.mxu0 0.0
        %705 = vmatpush2.xpose.msra.mxu0 0.0
        %706 = vmatprep.subr.mxu0 0.0
        %707 = vmatpush2.xpose.msra.mxu0 0.0
        %708 = vmatprep.subr.mxu0 0.0
        %709 = vmatpush2.xpose.msra.mxu0 0.0
        %710 = vmatprep.subr.mxu0 0.0
        %711 = vmatpush2.xpose.msra.mxu0 0.0
        %712 = vmatprep.subr.mxu0 0.0
        %713 = vmatpush2.xpose.msra.mxu0 0.0
        %714 = vmatprep.subr.mxu0 0.0
        %715 = vmatpush2.xpose.msra.mxu0 0.0
        %716 = vmatprep.subr.mxu0 0.0
        %717 = vmatpush2.xpose.msra.mxu0 0.0
        %718 = vmatprep.subr.mxu0 0.0
        %719 = vmatpush2.xpose.msra.mxu0 0.0
        %720 = vmatprep.subr.mxu0 0.0
        %721 = vmatpush2.xpose.msra.mxu0 0.0
        %722 = vmatprep.subr.mxu0 0.0
        %723 = vmatpush2.xpose.msra.mxu0 0.0
        %724 = vmatprep.subr.mxu0 0.0
        %725 = vmatpush2.xpose.msra.mxu0 0.0
        %726 = vmatprep.subr.mxu0 0.0
        %727 = vmatpush2.xpose.msra.mxu0 0.0
        %728 = vmatprep.subr.mxu0 0.0
        %729 = vmatpush2.xpose.msra.mxu0 0.0
        %730 = vmatprep.mubr.f32.mxu0 0.0
        %731 = vmatmul.mubr.f32.gmra.mxu0 %v662
        %v732 = vpop.f32.mrf.mxu0
        %v733 = vadd.f32 0.0, %v732
        %v734 = vpop.f32.mrf.mxu0
        %735 = vdwg.mxu0
        %v736 = vsel %vm405, %v733, -inf
        %737 = vmax.xlane.f32.xlu0 %v736
        %v738 = vpop.xlane.xlu0 %737
        %v739 = vsub.f32 %v733, %v738
        %v740 = vmul.f32 %v739, 1.442695
        %v741 = vpow.pop %v740
        %v742 = vsel %vm405, %v741, 0.0
        %743 = vadd.xlane.f32.xlu0 %v742
        %v744 = vpop.xlane.xlu0 %743
        %v745 = vrcp.pop %v744
        %v746 = vmul.f32 %v741, %v745
        %747 = vrot.lane.b32.xlu0 %v417, 64
        %v748 = vpop.permute.xlu0 %747
        %v751 = vsel %vm405, %v746, 0
        %753 = vmatprep.subr.mxu0 0.0
        %754 = vmatpush1.msra.mxu0 0.0
        %755 = vmatprep.subr.mxu0 0.0
        %756 = vmatpush1.msra.mxu0 0.0
        %757 = vmatprep.subr.mxu0 0.0
        %758 = vmatpush1.msra.mxu0 0.0
        %759 = vmatprep.subr.mxu0 0.0
        %760 = vmatpush1.msra.mxu0 0.0
        %761 = vmatprep.subr.mxu0 0.0
        %762 = vmatpush1.msra.mxu0 0.0
        %763 = vmatprep.subr.mxu0 0.0
        %764 = vmatpush1.msra.mxu0 0.0
        %765 = vmatprep.subr.mxu0 0.0
        %766 = vmatpush1.msra.mxu0 0.0
        %767 = vmatprep.subr.mxu0 0.0
        %768 = vmatpush1.msra.mxu0 0.0
        %769 = vmatprep.subr.mxu0 0.0
        %770 = vmatpush1.msra.mxu0 0.0
        %771 = vmatprep.subr.mxu0 0.0
        %772 = vmatpush1.msra.mxu0 0.0
        %773 = vmatprep.subr.mxu0 0.0
        %774 = vmatpush1.msra.mxu0 0.0
        %775 = vmatprep.subr.mxu0 0.0
        %776 = vmatpush1.msra.mxu0 0.0
        %777 = vmatprep.subr.mxu0 0.0
        %778 = vmatpush1.msra.mxu0 0.0
        %779 = vmatprep.subr.mxu0 0.0
        %780 = vmatpush1.msra.mxu0 0.0
        %781 = vmatprep.subr.mxu0 0.0
        %782 = vmatpush1.msra.mxu0 0.0
        %783 = vmatprep.subr.mxu0 0.0
        %784 = vmatpush1.msra.mxu0 %v748
        %785 = vmatprep.subr.mxu0 0.0
        %786 = vmatpush2.msra.mxu0 0.0
        %787 = vmatprep.subr.mxu0 0.0
        %788 = vmatpush2.msra.mxu0 0.0
        %789 = vmatprep.subr.mxu0 0.0
        %790 = vmatpush2.msra.mxu0 0.0
        %791 = vmatprep.subr.mxu0 0.0
        %792 = vmatpush2.msra.mxu0 0.0
        %793 = vmatprep.subr.mxu0 0.0
        %794 = vmatpush2.msra.mxu0 0.0
        %795 = vmatprep.subr.mxu0 0.0
        %796 = vmatpush2.msra.mxu0 0.0
        %797 = vmatprep.subr.mxu0 0.0
        %798 = vmatpush2.msra.mxu0 0.0
        %799 = vmatprep.subr.mxu0 0.0
        %800 = vmatpush2.msra.mxu0 0.0
        %801 = vmatprep.subr.mxu0 0.0
        %802 = vmatpush2.msra.mxu0 0.0
        %803 = vmatprep.subr.mxu0 0.0
        %804 = vmatpush2.msra.mxu0 0.0
        %805 = vmatprep.subr.mxu0 0.0
        %806 = vmatpush2.msra.mxu0 0.0
        %807 = vmatprep.subr.mxu0 0.0
        %808 = vmatpush2.msra.mxu0 0.0
        %809 = vmatprep.subr.mxu0 0.0
        %810 = vmatpush2.msra.mxu0 0.0
        %811 = vmatprep.subr.mxu0 0.0
        %812 = vmatpush2.msra.mxu0 0.0
        %813 = vmatprep.subr.mxu0 0.0
        %814 = vmatpush2.msra.mxu0 0.0
        %815 = vmatprep.subr.mxu0 0.0
        %816 = vmatpush2.msra.mxu0 0.0
        %817 = vmatprep.mubr.f32.mxu0 0.0
        %818 = vmatmul.mubr.f32.gmra.mxu0 %v751
        %v819 = vpop.f32.mrf.mxu0
        %v820 = vadd.f32 0.0, %v819
        %v821 = vpop.f32.mrf.mxu0
        %822 = vdwg.mxu0
        %v823 = vadd.f32 %v657, %v746
        %824 = vrot.lane.b32.xlu0 %v326, 32
        %v825 = vpop.permute.xlu0 %824
        %826 = vrot.lane.b32.xlu0 %v327, 32
        %v827 = vpop.permute.xlu0 %826
        %v828 = vsel %vm328, %v825, 0
        %v830 = vsel %vm328, %v827, 0
        %832 = vmatprep.subr.mxu0 0.0
        %833 = vmatpush1.xpose.msra.mxu0 0.0
        %834 = vmatprep.subr.mxu0 0.0
        %835 = vmatpush1.xpose.msra.mxu0 0.0
        %836 = vmatprep.subr.mxu0 0.0
        %837 = vmatpush1.xpose.msra.mxu0 0.0
        %838 = vmatprep.subr.mxu0 0.0
        %839 = vmatpush1.xpose.msra.mxu0 0.0
        %840 = vmatprep.subr.mxu0 0.0
        %841 = vmatpush1.xpose.msra.mxu0 0.0
        %842 = vmatprep.subr.mxu0 0.0
        %843 = vmatpush1.xpose.msra.mxu0 0.0
        %844 = vmatprep.subr.mxu0 0.0
        %845 = vmatpush1.xpose.msra.mxu0 0.0
        %846 = vmatprep.subr.mxu0 0.0
        %847 = vmatpush1.xpose.msra.mxu0 0.0
        %848 = vmatprep.subr.mxu0 0.0
        %849 = vmatpush1.xpose.msra.mxu0 0.0
        %850 = vmatprep.subr.mxu0 0.0
        %851 = vmatpush1.xpose.msra.mxu0 0.0
        %852 = vmatprep.subr.mxu0 0.0
        %853 = vmatpush1.xpose.msra.mxu0 0.0
        %854 = vmatprep.subr.mxu0 0.0
        %855 = vmatpush1.xpose.msra.mxu0 0.0
        %856 = vmatprep.subr.mxu0 0.0
        %857 = vmatpush1.xpose.msra.mxu0 0.0
        %858 = vmatprep.subr.mxu0 0.0
        %859 = vmatpush1.xpose.msra.mxu0 0.0
        %860 = vmatprep.subr.mxu0 0.0
        %861 = vmatpush1.xpose.msra.mxu0 0.0
        %862 = vmatprep.subr.mxu0 0.0
        %863 = vmatpush1.xpose.msra.mxu0 %v830
        %864 = vmatprep.subr.mxu0 0.0
        %865 = vmatpush2.xpose.msra.mxu0 0.0
        %866 = vmatprep.subr.mxu0 0.0
        %867 = vmatpush2.xpose.msra.mxu0 0.0
        %868 = vmatprep.subr.mxu0 0.0
        %869 = vmatpush2.xpose.msra.mxu0 0.0
        %870 = vmatprep.subr.mxu0 0.0
        %871 = vmatpush2.xpose.msra.mxu0 0.0
        %872 = vmatprep.subr.mxu0 0.0
        %873 = vmatpush2.xpose.msra.mxu0 0.0
        %874 = vmatprep.subr.mxu0 0.0
        %875 = vmatpush2.xpose.msra.mxu0 0.0
        %876 = vmatprep.subr.mxu0 0.0
        %877 = vmatpush2.xpose.msra.mxu0 0.0
        %878 = vmatprep.subr.mxu0 0.0
        %879 = vmatpush2.xpose.msra.mxu0 0.0
        %880 = vmatprep.subr.mxu0 0.0
        %881 = vmatpush2.xpose.msra.mxu0 0.0
        %882 = vmatprep.subr.mxu0 0.0
        %883 = vmatpush2.xpose.msra.mxu0 0.0
        %884 = vmatprep.subr.mxu0 0.0
        %885 = vmatpush2.xpose.msra.mxu0 0.0
        %886 = vmatprep.subr.mxu0 0.0
        %887 = vmatpush2.xpose.msra.mxu0 0.0
        %888 = vmatprep.subr.mxu0 0.0
        %889 = vmatpush2.xpose.msra.mxu0 0.0
        %890 = vmatprep.subr.mxu0 0.0
        %891 = vmatpush2.xpose.msra.mxu0 0.0
        %892 = vmatprep.subr.mxu0 0.0
        %893 = vmatpush2.xpose.msra.mxu0 0.0
        %894 = vmatprep.subr.mxu0 0.0
        %895 = vmatpush2.xpose.msra.mxu0 0.0
        %896 = vmatprep.mubr.f32.mxu0 0.0
        %897 = vmatmul.mubr.f32.gmra.mxu0 %v828
        %v898 = vpop.f32.mrf.mxu0
        %v899 = vadd.f32 0.0, %v898
        %v900 = vpop.f32.mrf.mxu0
        %901 = vdwg.mxu0
        %v902 = vsel %vm405, %v899, -inf
        %903 = vmax.xlane.f32.xlu0 %v902
        %v904 = vpop.xlane.xlu0 %903
        %v905 = vsub.f32 %v899, %v904
        %v906 = vmul.f32 %v905, 1.442695
        %v907 = vpow.pop %v906
        %v908 = vsel %vm405, %v907, 0.0
        %909 = vadd.xlane.f32.xlu0 %v908
        %v910 = vpop.xlane.xlu0 %909
        %v911 = vrcp.pop %v910
        %v912 = vmul.f32 %v907, %v911
        %913 = vrot.lane.b32.xlu0 %v417, 32
        %v914 = vpop.permute.xlu0 %913
        %v917 = vsel %vm405, %v912, 0
        %919 = vmatprep.subr.mxu0 0.0
        %920 = vmatpush1.msra.mxu0 0.0
        %921 = vmatprep.subr.mxu0 0.0
        %922 = vmatpush1.msra.mxu0 0.0
        %923 = vmatprep.subr.mxu0 0.0
        %924 = vmatpush1.msra.mxu0 0.0
        %925 = vmatprep.subr.mxu0 0.0
        %926 = vmatpush1.msra.mxu0 0.0
        %927 = vmatprep.subr.mxu0 0.0
        %928 = vmatpush1.msra.mxu0 0.0
        %929 = vmatprep.subr.mxu0 0.0
        %930 = vmatpush1.msra.mxu0 0.0
        %931 = vmatprep.subr.mxu0 0.0
        %932 = vmatpush1.msra.mxu0 0.0
        %933 = vmatprep.subr.mxu0 0.0
        %934 = vmatpush1.msra.mxu0 0.0
        %935 = vmatprep.subr.mxu0 0.0
        %936 = vmatpush1.msra.mxu0 0.0
        %937 = vmatprep.subr.mxu0 0.0
        %938 = vmatpush1.msra.mxu0 0.0
        %939 = vmatprep.subr.mxu0 0.0
        %940 = vmatpush1.msra.mxu0 0.0
        %941 = vmatprep.subr.mxu0 0.0
        %942 = vmatpush1.msra.mxu0 0.0
        %943 = vmatprep.subr.mxu0 0.0
        %944 = vmatpush1.msra.mxu0 0.0
        %945 = vmatprep.subr.mxu0 0.0
        %946 = vmatpush1.msra.mxu0 0.0
        %947 = vmatprep.subr.mxu0 0.0
        %948 = vmatpush1.msra.mxu0 0.0
        %949 = vmatprep.subr.mxu0 0.0
        %950 = vmatpush1.msra.mxu0 %v914
        %951 = vmatprep.subr.mxu0 0.0
        %952 = vmatpush2.msra.mxu0 0.0
        %953 = vmatprep.subr.mxu0 0.0
        %954 = vmatpush2.msra.mxu0 0.0
        %955 = vmatprep.subr.mxu0 0.0
        %956 = vmatpush2.msra.mxu0 0.0
        %957 = vmatprep.subr.mxu0 0.0
        %958 = vmatpush2.msra.mxu0 0.0
        %959 = vmatprep.subr.mxu0 0.0
        %960 = vmatpush2.msra.mxu0 0.0
        %961 = vmatprep.subr.mxu0 0.0
        %962 = vmatpush2.msra.mxu0 0.0
        %963 = vmatprep.subr.mxu0 0.0
        %964 = vmatpush2.msra.mxu0 0.0
        %965 = vmatprep.subr.mxu0 0.0
        %966 = vmatpush2.msra.mxu0 0.0
        %967 = vmatprep.subr.mxu0 0.0
        %968 = vmatpush2.msra.mxu0 0.0
        %969 = vmatprep.subr.mxu0 0.0
        %970 = vmatpush2.msra.mxu0 0.0
        %971 = vmatprep.subr.mxu0 0.0
        %972 = vmatpush2.msra.mxu0 0.0
        %973 = vmatprep.subr.mxu0 0.0
        %974 = vmatpush2.msra.mxu0 0.0
        %975 = vmatprep.subr.mxu0 0.0
        %976 = vmatpush2.msra.mxu0 0.0
        %977 = vmatprep.subr.mxu0 0.0
        %978 = vmatpush2.msra.mxu0 0.0
        %979 = vmatprep.subr.mxu0 0.0
        %980 = vmatpush2.msra.mxu0 0.0
        %981 = vmatprep.subr.mxu0 0.0
        %982 = vmatpush2.msra.mxu0 0.0
        %983 = vmatprep.mubr.f32.mxu0 0.0
        %984 = vmatmul.mubr.f32.gmra.mxu0 %v917
        %v985 = vpop.f32.mrf.mxu0
        %v986 = vadd.f32 0.0, %v985
        %v987 = vpop.f32.mrf.mxu0
        %988 = vdwg.mxu0
        %v989 = vadd.f32 %v823, %v912
        %991 = vrot.lane.b32.xlu0 %v654, 32
        %v992 = vpop.permute.xlu0 %991
        %995 = vrot.lane.b32.xlu0 %v820, 64
        %v996 = vpop.permute.xlu0 %995
        %999 = vrot.lane.b32.xlu0 %v986, 96
        %v1000 = vpop.permute.xlu0 %999
        %v1002 = vsel %vm328, %v488, %v992
        %vm1003 = vcmask 523264
        %v1004 = vsel %vm1003, %v1002, %v996
        %vm1005 = vcmask 785408
        %v1006 = vsel %vm1005, %v1004, %v1000
        %1007 = vst [vmem:[%s318] sm:$0xff] %v1006
        %v1008 = vld [vmem:[%s284] sm:$0xff]
        %v1009 = vadd.f32 %v1008, %v989
        %1010 = vst.msk [vmem:[%s284] sm:$0xff] %vm405, %v1009
        // Predicated region
        $region37: #{attention_forward.1} parent=31 // pred_check
          %p1011 = pneg %p319
        $region38: #{attention_forward.1} parent=31 // pred_check_branch
          %1013 = sbr.rel (%p1011) target = $region40
        $region39: #{attention_forward.1} parent=31 // pred_region
          %v1014 = vld [vmem:[%s284] sm:$0xff]
          %v1015 = vmul.f32 %v1014, 0.25
          %1016 = vst.msk [vmem:[%s284] sm:$0xff] %vm405, %v1015
        $region40: #{attention_forward.1} parent=31 // pred_fallthru
          _
        %p1017 = scmp.lt.s32.totalorder %s24, 1
        %s1018 = scalar_select %p1017, %s24, 1
        %p1019 = scmp.lt.s32.totalorder %s25, 0
        %s1020 = scalar_select %p1019, %s25, 0
        %p1021 = scmp.lt.s32.totalorder %s26, 0
        %s1022 = scalar_select %p1021, %s26, 0
        %s1023 = sadd.s32 %s1022, %s1020
        %s1024 = sadd.s32 %s1023, %s1018
        %s1025 = smul.addr %s1024, 8
        %s1026 = scalar_lea.vmem %s3, %s1025
        %s1027 = sand.u32 %s164, 1
        %s1028 = scalar_lea.sflag [#allocation3], %s1027
        %s1029 = sand.u32 %s164, 1
        %s1030 = smul.addr %s1029, 8
        %s1031 = scalar_lea.vmem [#allocation2], %s1030
        // Predicated region
        $region41: #{attention_forward.1} parent=31 // pred_check
          %p1032 = pneg %p146
        $region42: #{attention_forward.1} parent=31 // pred_check_branch
          %1034 = sbr.rel (%p1032) target = $region44
        $region43: #{attention_forward.1} parent=31 // pred_region
          _
        $region44: #{attention_forward.1} parent=31 // pred_fallthru
          _
        // Predicated region
        $region45: #{attention_forward.1} parent=31 // pred_check
          %p1035 = pneg %p174
        $region46: #{attention_forward.1} parent=31 // pred_check_branch
          %1037 = sbr.rel (%p1035) target = $region48
        $region47: #{attention_forward.1} parent=31 // pred_region
          %s1039 = ssub.s32 128, 128
          %1040 = vsyncadd %s1028, %s1039
          %s1041 = sadd.s32 %s25, %s24
          %s1042 = smul.addr %s1041, 128
          %s1043 = scalar_lea.hbm %s4, %s1042
          %s1045 = sshll.u32 %s1031, 4
          %s1046 = int_to_ptr.vmem [resolvable:$true] %s1045
          %1048 = dma.vmem_to_hbm [thread:$0]  %s1046, 128, %s1043, %s1028
        $region48: #{attention_forward.1} parent=31 // pred_fallthru
          _
      $region32: #{attention_forward.1} parent=5 // pred_fallthru
        _
      %p1049 = scmp.le.s32.totalorder 2, %s14
      // Predicated region
      $region49: #{attention_forward.1} parent=5 // pred_check
        %p1050 = pneg %p1049
      $region50: #{attention_forward.1} parent=5 // pred_check_branch
        %1052 = sbr.rel (%p1050) target = $region52
      $region51: #{attention_forward.1} parent=5 // pred_region
        %s1053 = ssub.s32 %s14, 2
        // Predicated region
        $region53: #{attention_forward.1} parent=51 // pred_check
          %p1054 = pneg %p152
        $region54: #{attention_forward.1} parent=51 // pred_check_branch
          %1056 = sbr.rel (%p1054) target = $region56
        $region55: #{attention_forward.1} parent=51 // pred_region
          %p1057 = scmp.lt.s32.totalorder %s27, 1
          %s1058 = scalar_select %p1057, %s27, 1
          %p1059 = scmp.lt.s32.totalorder %s28, 0
          %s1060 = scalar_select %p1059, %s28, 0
          %p1061 = scmp.lt.s32.totalorder %s29, 0
          %s1062 = scalar_select %p1061, %s29, 0
          %s1063 = sadd.s32 %s1062, %s1060
          %s1064 = sadd.s32 %s1063, %s1058
          %s1065 = smul.addr %s1064, 8
          %s1066 = scalar_lea.vmem %s3, %s1065
        $region56: #{attention_forward.1} parent=51 // pred_fallthru
          _
        // Predicated region
        $region57: #{attention_forward.1} parent=51 // pred_check
          %p1067 = pneg %p180
        $region58: #{attention_forward.1} parent=51 // pred_check_branch
          %1069 = sbr.rel (%p1067) target = $region60
        $region59: #{attention_forward.1} parent=51 // pred_region
          %s1070 = sand.u32 %s165, 1
          %s1071 = scalar_lea.sflag [#allocation3], %s1070
          %s1072 = sand.u32 %s165, 1
          %s1073 = smul.addr %s1072, 8
          %s1074 = scalar_lea.vmem [#allocation2], %s1073
          %1075 = dma.done %s1071, 128
        $region60: #{attention_forward.1} parent=51 // pred_fallthru
          _
      $region52: #{attention_forward.1} parent=5 // pred_fallthru
        _
    $region6: #{attention_forward.1} parent=1 // loop_footer
      %s18 = sadd.s32 1, %s14
    $region7: #{attention_forward.1} parent=1 // loop_footer_branch
      %13 = sbr.rel target = $region3
    $region8: #{attention_forward.1} parent=1 // loop_exit
      _
    %1076 = vsyncpa [#allocation3], 1
    %s1077 = scalar_lea.sflag [#allocation3], 1
    %1078 = vsyncpa %s1077, 1

</llo_original>
